<compile_context>
chip_gen: v6e
topology: v6e:2x2x1
jax: 0.10.0
libtpu: 0.0.40
codegen_flags: <defaults>
</compile_context>

<pallas_src>
import jax
import jax.numpy as jnp
from jax.experimental import pallas as pl
from jax.experimental.pallas import tpu as pltpu

LANE = 128
_FAST_PATH_BYTES = 256 * 1024          # below this, plain XLA fusion wins


def _target_block_bytes() -> int:
    """Generation-aware block size: ~4 MiB on v7x (3.2 TB/s HBM amortizes the
    ~0.35 us per-step overhead better), ~2 MiB on v5e/v6e."""
    try:
        kind = jax.devices()[0].device_kind.lower()
    except Exception:
        kind = ""
    big = ("v7" in kind) or ("7x" in kind)
    return (4 if big else 2) * 1024 * 1024


def _h_swish_math(x):
    # h_sigmoid(x) = relu6(x + 3) / 6 ; h_swish(x) = x * h_sigmoid(x)
    # Compute in f32 (free here — kernel is HBM-bound), cast back at the end.
    xf = x.astype(jnp.float32)
    hs = jnp.clip(xf + 3.0, 0.0, 6.0) * (1.0 / 6.0)
    return (xf * hs).astype(x.dtype)


def _h_swish_kernel(x_ref, o_ref):
    o_ref[...] = _h_swish_math(x_ref[...])


def _h_swish_slab(x2: jax.Array) -> jax.Array:
    """Pallas call on a lane-dense (rows, 128) slab (rows >> sublane count)."""
    rows, _ = x2.shape
    itemsize = jnp.dtype(x2.dtype).itemsize
    sub = max(8, 32 // itemsize)       # 8 f32 / 16 bf16 / 32 int8-fp8 sublanes

    tr = _target_block_bytes() // (LANE * itemsize)
    tr = max(sub, (tr // sub) * sub)   # sublane-aligned row tile
    # Guarantee >= 4 grid steps so v7x's two TensorCores both get work and the
    # DMA pipeline overlaps (a 1-step grid serializes load/compute/store).
    tr = min(tr, max(sub, (pl.cdiv(rows, 4) // sub) * sub))
    tr = min(tr, rows)
    grid = (pl.cdiv(rows, tr),)        # ragged last block masked by Pallas

    n_elems = rows * LANE
    return pl.pallas_call(
        _h_swish_kernel,
        out_shape=jax.ShapeDtypeStruct((rows, LANE), x2.dtype),
        grid_spec=pltpu.PrefetchScalarGridSpec(
            num_scalar_prefetch=0,
            grid=grid,
            in_specs=[pl.BlockSpec((tr, LANE), lambda i: (i, 0))],
            out_specs=pl.BlockSpec((tr, LANE), lambda i: (i, 0)),
        ),
        compiler_params=pltpu.CompilerParams(
            dimension_semantics=("parallel",),
            vmem_limit_bytes=32 * 1024 * 1024,  # 4 MiB blocks x (in+out) x 2 buf = 16 MiB
        ),
        cost_estimate=pl.CostEstimate(
            flops=5 * n_elems,
            transcendentals=0,
            bytes_accessed=2 * n_elems * itemsize,
        ),
    )(x2)


def h_swish(x: jax.Array) -> jax.Array:
    """Elementwise h_swish(x) = x * relu6(x + 3) / 6 for floating dtypes."""
    if not jnp.issubdtype(x.dtype, jnp.floating):
        raise TypeError(f"h_swish expects a floating dtype, got {x.dtype}")

    orig_shape = x.shape
    total = x.size
    itemsize = jnp.dtype(x.dtype).itemsize

    # Tiny activations: kernel launch + DMA setup dominates -> plain XLA fusion.
    if total * itemsize <= _FAST_PATH_BYTES or total < LANE:
        return _h_swish_math(x)

    xf = x.reshape(-1)                          # reshape is free
    aligned = (total // LANE) * LANE

    if aligned == total:
        # Zero-copy path: lane-dense slab, no pad, no slice.
        out2 = _h_swish_slab(xf.reshape(total // LANE, LANE))
        return out2.reshape(orig_shape)

    # Ragged path: Pallas on the 128-aligned bulk, tiny jnp compute on the
    # < 128 element tail (avoids full-array pad + slice HBM round-trips).
    bulk = xf[:aligned].reshape(aligned // LANE, LANE)
    tail = xf[aligned:]
    out_bulk = _h_swish_slab(bulk).reshape(-1)
    out_tail = _h_swish_math(tail)
    return jnp.concatenate([out_bulk, out_tail]).reshape(orig_shape)


def h_swish_ref(x):
    xf = x.astype(jnp.float32)
    return xf * (jnp.clip(xf + 3.0, 0.0, 6.0) / 6.0)


if __name__ == "__main__":
    # 1) Small NCHW input (the module's typical use) -> fast path.
    x0 = jax.random.normal(jax.random.PRNGKey(0), (2, 4, 16, 16), jnp.float32) * 4.0
    y0 = jax.block_until_ready(h_swish(x0))
    assert y0.shape == x0.shape and y0.dtype == x0.dtype
    assert jnp.allclose(y0, h_swish_ref(x0), atol=1e-6, rtol=1e-6)

    # 2) Larger, 128-aligned element count -> Pallas slab path (zero-copy).
    x1 = jax.random.normal(jax.random.PRNGKey(1), (8, 16, 32, 32), jnp.float32) * 4.0
    y1 = jax.block_until_ready(h_swish(x1))
    assert jnp.allclose(y1, h_swish_ref(x1), atol=1e-6, rtol=1e-6)

    # 3) Larger ragged element count -> Pallas bulk + jnp tail path.
    x2 = jax.random.normal(jax.random.PRNGKey(2), (9, 13, 31, 23), jnp.float32) * 4.0
    y2 = jax.block_until_ready(h_swish(x2))
    assert jnp.allclose(y2, h_swish_ref(x2), atol=1e-6, rtol=1e-6)

    # 4) bf16 path (16-sublane tiles; math done in f32 inside the kernel).
    x3 = (jax.random.normal(jax.random.PRNGKey(3), (8, 32, 32, 32)) * 4.0).astype(jnp.bfloat16)
    y3 = jax.block_until_ready(h_swish(x3))
    assert y3.shape == x3.shape and y3.dtype == jnp.bfloat16
    assert jnp.allclose(y3.astype(jnp.float32),
                        h_swish_ref(x3.astype(jnp.float32)),
                        atol=5e-2, rtol=5e-2)

    print("KERNEL_OK")
</pallas_src>

<mosaic_0001>
module attributes {stable_mosaic.version = 11 : i64} {
  func.func @_h_swish_kernel(%arg0: i32, %arg1: memref<256x128xf32, #tpu.memory_space<vmem>>, %arg2: memref<256x128xf32, #tpu.memory_space<vmem>>) attributes {dimension_semantics = [#tpu.dimension_semantics<parallel>], iteration_bounds = array<i64: 4>, scalar_prefetch = 0 : i64, scratch_operands = 0 : i64, tpu.core_type = #tpu.core_type<tc>, window_params = [{transform_indices = @transform_0, window_bounds = array<i64: 256, 128>}, {transform_indices = @transform_1, window_bounds = array<i64: 256, 128>}]} {
    %c0 = arith.constant 0 : index
    %c0_0 = arith.constant 0 : index
    %0 = vector.load %arg1[%c0, %c0_0] : memref<256x128xf32, #tpu.memory_space<vmem>>, vector<256x128xf32>
    %cst = arith.constant 3.000000e+00 : f32
    %1 = vector.broadcast %cst : f32 to vector<256x128xf32>
    %2 = arith.addf %0, %1 : vector<256x128xf32>
    %cst_1 = arith.constant 0.000000e+00 : f32
    %cst_2 = arith.constant 6.000000e+00 : f32
    %3 = vector.broadcast %cst_1 : f32 to vector<256x128xf32>
    %4 = arith.maximumf %3, %2 : vector<256x128xf32>
    %5 = vector.broadcast %cst_2 : f32 to vector<256x128xf32>
    %6 = arith.minimumf %5, %4 : vector<256x128xf32>
    %cst_3 = arith.constant 0.166666672 : f32
    %7 = vector.broadcast %cst_3 : f32 to vector<256x128xf32>
    %8 = arith.mulf %6, %7 : vector<256x128xf32>
    %9 = arith.mulf %0, %8 : vector<256x128xf32>
    %c0_4 = arith.constant 0 : index
    %c0_5 = arith.constant 0 : index
    %10 = vector.load %arg2[%c0_4, %c0_5] : memref<256x128xf32, #tpu.memory_space<vmem>>, vector<256x128xf32>
    tpu.vector_store %arg2[%c0_4, %c0_5], %9 {strides = array<i32>} : memref<256x128xf32, #tpu.memory_space<vmem>>, vector<256x128xf32>,
    return
  }
  func.func @transform_0(%arg0: i32) -> (i32, i32) {
    %c0_i32 = arith.constant 0 : i32
    %c0_i32_0 = arith.constant 0 : i32
    return %arg0, %c0_i32 : i32, i32
  }
  func.func @transform_1(%arg0: i32) -> (i32, i32) {
    %c0_i32 = arith.constant 0 : i32
    %c0_i32_0 = arith.constant 0 : i32
    return %arg0, %c0_i32 : i32, i32
  }
}

</mosaic_0001>

<llo_original>
// kernel: tpu_custom_call.1
$region0: #{tpu_custom_call.1}
  #allocation0 [shape = 'u32[]', space=smem, size = 0x4, offset = 0x4, fixed_abs, tag = 'smem constant byte address 0x4 - core index']
  #allocation1 [shape = 'u32[144,128]{1,0:T(1,128)}', space=vmem, size = 0x12000, scoped, tag = 'internal scratch']
  %s0 = inlined_call_operand.hbm [shape: f32[1024,128], index: 0, kind: input, shape index: {}]
  %s1 = inlined_call_operand.hbm [shape: f32[1024,128], index: 1, kind: output, shape index: {}]
  %s2 = sld [smem:[#allocation0]]
  $region41: #{tpu_custom_call.1} parent=0
    _
  %s4 = ssub.s32 1, %s2
  %s5 = scalar_select 0, %s4, %s2
  $region1: #{tpu_custom_call.1} parent=0
    #allocation2 [shape = 'u8[262144]{0}', space=vmem, size = 0x40000, scoped, tag = 'input window, operand 0']
    #allocation3 [shape = 's32[2]{0}', space=sflag, size = 0x8, scoped, tag = 'scoped memory for tpu_custom_call.1']
    #allocation4 [shape = 's32[2]{0}', space=sflag, size = 0x8, scoped, tag = 'scoped memory for tpu_custom_call.1']
    #allocation5 [shape = 'u8[262144]{0}', space=vmem, size = 0x40000, scoped, tag = 'output window, operand 0']
    %6 = vsyncpa [#allocation3], 0
    %s7 = scalar_lea.sflag [#allocation3], 1
    %8 = vsyncpa %s7, 0
    %9 = vsyncpa [#allocation4], 0
    %s10 = scalar_lea.sflag [#allocation4], 1
    %11 = vsyncpa %s10, 0
    loop: start=0, step=1, limit=6
    $region2: #{tpu_custom_call.1} parent=1 // loop_pre_header
      _
    $region3: #{tpu_custom_call.1} parent=1 // loop_header
      %s13 = sphi 0, %s17
      %p14 = scmp.ge.s32.totalorder %s13, 6
      %s23 = sphi 0, %s25
      %s26 = sphi 0, %s23
      %s27 = sphi 0, %s26
      %s43 = sphi 0, %s27
      %s49 = sphi 0, %s51
      %s52 = sphi 0, %s49
      %s53 = sphi 0, %s52
      %s69 = sphi 0, %s53
    $region4: #{tpu_custom_call.1} parent=1 // loop_header_branch
      %16 = sbr.rel (%p14) target = $region8
    $region5: #{tpu_custom_call.1} parent=1 // loop_body
      %s18 = ssub.s32 %s13, 1
      %s19 = ssub.s32 %s13, 2
      %s20 = sadd.s32 %s13, 1
      %s21 = ssub.s32 %s13, %s20
      %p22 = scmp.eq.s32.totalorder %s21, 0
      %s24 = sadd.s32 %s23, 1
      %s25 = scalar_select %p22, %s23, %s24
      %p28 = pneg %p22
      %p29 = scmp.eq.s32.totalorder %s13, 3
      %p30 = por %p28, %p29
      %p31 = scmp.ne.s32.totalorder %s23, %s26
      %p32 = scmp.eq.s32.totalorder %s13, 0
      %p33 = por %p31, %p32
      %p34 = scmp.ne.s32.totalorder %s23, %s26
      %p35 = scmp.eq.s32.totalorder %s18, 3
      %p36 = por %p34, %p35
      %p37 = scmp.ne.s32.totalorder %s26, %s27
      %p38 = scmp.eq.s32.totalorder %s18, 0
      %p39 = por %p37, %p38
      %p40 = scmp.ne.s32.totalorder %s26, %s27
      %p41 = scmp.eq.s32.totalorder %s19, 3
      %p42 = por %p40, %p41
      %p44 = scmp.ne.s32.totalorder %s27, %s43
      %p45 = scmp.eq.s32.totalorder %s19, 0
      %p46 = por %p44, %p45
      %s47 = ssub.s32 %s13, %s20
      %p48 = scmp.eq.s32.totalorder %s47, 0
      %s50 = sadd.s32 %s49, 1
      %s51 = scalar_select %p48, %s49, %s50
      %p54 = pneg %p48
      %p55 = scmp.eq.s32.totalorder %s13, 3
      %p56 = por %p54, %p55
      %p57 = scmp.ne.s32.totalorder %s49, %s52
      %p58 = scmp.eq.s32.totalorder %s13, 0
      %p59 = por %p57, %p58
      %p60 = scmp.ne.s32.totalorder %s49, %s52
      %p61 = scmp.eq.s32.totalorder %s18, 3
      %p62 = por %p60, %p61
      %p63 = scmp.ne.s32.totalorder %s52, %s53
      %p64 = scmp.eq.s32.totalorder %s18, 0
      %p65 = por %p63, %p64
      %p66 = scmp.ne.s32.totalorder %s52, %s53
      %p67 = scmp.eq.s32.totalorder %s19, 3
      %p68 = por %p66, %p67
      %p70 = scmp.ne.s32.totalorder %s53, %s69
      %p71 = scmp.eq.s32.totalorder %s19, 0
      %p72 = por %p70, %p71
      %p73 = scmp.le.s32.totalorder 1, %s13
      %p74 = scmp.lt.s32.totalorder %s13, 5
      %p75 = pnand %p73, %p74
      %p76 = pneg %p75
      // Predicated region
      $region9: #{tpu_custom_call.1} parent=5 // pred_check
        _
      $region10: #{tpu_custom_call.1} parent=5 // pred_check_branch
        %78 = sbr.rel (%p75) target = $region12
      $region11: #{tpu_custom_call.1} parent=5 // pred_region
        %s79 = ssub.s32 %s13, 1
      $region12: #{tpu_custom_call.1} parent=5 // pred_fallthru
        _
      %p80 = scmp.lt.s32.totalorder %s13, 4
      // Predicated region
      $region13: #{tpu_custom_call.1} parent=5 // pred_check
        %p81 = pneg %p80
      $region14: #{tpu_custom_call.1} parent=5 // pred_check_branch
        %83 = sbr.rel (%p81) target = $region16
      $region15: #{tpu_custom_call.1} parent=5 // pred_region
        // Predicated region
        $region17: #{tpu_custom_call.1} parent=15 // pred_check
          %p84 = pneg %p33
        $region18: #{tpu_custom_call.1} parent=15 // pred_check_branch
          %86 = sbr.rel (%p84) target = $region20
        $region19: #{tpu_custom_call.1} parent=15 // pred_region
          %s87 = sand.u32 %s23, 1
          %s88 = scalar_lea.sflag [#allocation3], %s87
          %s89 = sand.u32 %s23, 1
          %s90 = smul.addr %s89, 256
          %s91 = scalar_lea.vmem [#allocation2], %s90
          %s92 = smul.u32 32, %s13
          %s94 = ssub.s32 4096, 4096
          %95 = vsyncadd %s88, %s94
          %s96 = smul.addr %s92, 128
          %s97 = scalar_lea.hbm %s0, %s96
          %s98 = sshll.u32 %s91, 4
          %s99 = int_to_ptr.vmem [resolvable:$true] %s98
          %104 = dma.hbm_to_vmem [thread:$0]  %s97, 4096, %s99, %s88, 128, 128, 8
        $region20: #{tpu_custom_call.1} parent=15 // pred_fallthru
          _
      $region16: #{tpu_custom_call.1} parent=5 // pred_fallthru
        _
      %p105 = scmp.le.s32.totalorder 1, %s13
      %p106 = scmp.lt.s32.totalorder %s13, 5
      %p107 = pnand %p105, %p106
      %p108 = pneg %p107
      // Predicated region
      $region21: #{tpu_custom_call.1} parent=5 // pred_check
        _
      $region22: #{tpu_custom_call.1} parent=5 // pred_check_branch
        %110 = sbr.rel (%p107) target = $region24
      $region23: #{tpu_custom_call.1} parent=5 // pred_region
        %s111 = ssub.s32 %s13, 1
        %s112 = sand.u32 %s26, 1
        %s113 = scalar_lea.sflag [#allocation3], %s112
        %s114 = sand.u32 %s26, 1
        %s115 = smul.addr %s114, 256
        %s116 = scalar_lea.vmem [#allocation2], %s115
        // Predicated region
        $region25: #{tpu_custom_call.1} parent=23 // pred_check
          %p117 = pneg %p39
        $region26: #{tpu_custom_call.1} parent=23 // pred_check_branch
          %119 = sbr.rel (%p117) target = $region28
        $region27: #{tpu_custom_call.1} parent=23 // pred_region
          %120 = dma.done %s113, 4096
        $region28: #{tpu_custom_call.1} parent=23 // pred_fallthru
          _
        %s121 = sand.u32 %s26, 1
        %s122 = scalar_lea.sflag [#allocation3], %s121
        %s123 = sand.u32 %s26, 1
        %s124 = smul.addr %s123, 256
        %s125 = scalar_lea.vmem [#allocation2], %s124
        %p126 = pneg %p39
        %p127 = pneg %p36
        %p128 = pneg %p65
        %p129 = pneg %p62
        %s130 = sand.u32 %s52, 1
        %s131 = scalar_lea.sflag [#allocation4], %s130
        %s132 = sand.u32 %s52, 1
        %s133 = smul.addr %s132, 256
        %s134 = scalar_lea.vmem [#allocation5], %s133
        %s135 = smul.u32 32, %s18
        %s136 = smul.u32 32, %s18
        %v137 = vld [vmem:[%s116] sm:$0xff]
        %v138 = vld [vmem:[%s116 + $0x8] sm:$0xff]
        %v139 = vld [vmem:[%s116 + $0x10] sm:$0xff]
        %v140 = vld [vmem:[%s116 + $0x18] sm:$0xff]
        %v141 = vld [vmem:[%s116 + $0x20] sm:$0xff]
        %v142 = vld [vmem:[%s116 + $0x28] sm:$0xff]
        %v143 = vld [vmem:[%s116 + $0x30] sm:$0xff]
        %v144 = vld [vmem:[%s116 + $0x38] sm:$0xff]
        %v145 = vld [vmem:[%s116 + $0x40] sm:$0xff]
        %v146 = vld [vmem:[%s116 + $0x48] sm:$0xff]
        %v147 = vld [vmem:[%s116 + $0x50] sm:$0xff]
        %v148 = vld [vmem:[%s116 + $0x58] sm:$0xff]
        %v149 = vld [vmem:[%s116 + $0x60] sm:$0xff]
        %v150 = vld [vmem:[%s116 + $0x68] sm:$0xff]
        %v151 = vld [vmem:[%s116 + $0x70] sm:$0xff]
        %v152 = vld [vmem:[%s116 + $0x78] sm:$0xff]
        %v153 = vld [vmem:[%s116 + $0x80] sm:$0xff]
        %v154 = vld [vmem:[%s116 + $0x88] sm:$0xff]
        %v155 = vld [vmem:[%s116 + $0x90] sm:$0xff]
        %v156 = vld [vmem:[%s116 + $0x98] sm:$0xff]
        %v157 = vld [vmem:[%s116 + $0xa0] sm:$0xff]
        %v158 = vld [vmem:[%s116 + $0xa8] sm:$0xff]
        %v159 = vld [vmem:[%s116 + $0xb0] sm:$0xff]
        %v160 = vld [vmem:[%s116 + $0xb8] sm:$0xff]
        %v161 = vld [vmem:[%s116 + $0xc0] sm:$0xff]
        %v162 = vld [vmem:[%s116 + $0xc8] sm:$0xff]
        %v163 = vld [vmem:[%s116 + $0xd0] sm:$0xff]
        %v164 = vld [vmem:[%s116 + $0xd8] sm:$0xff]
        %v165 = vld [vmem:[%s116 + $0xe0] sm:$0xff]
        %v166 = vld [vmem:[%s116 + $0xe8] sm:$0xff]
        %v167 = vld [vmem:[%s116 + $0xf0] sm:$0xff]
        %v168 = vld [vmem:[%s116 + $0xf8] sm:$0xff]
        %v169 = vadd.f32 %v137, 3.0
        %v170 = vadd.f32 %v138, 3.0
        %v171 = vadd.f32 %v139, 3.0
        %v172 = vadd.f32 %v140, 3.0
        %v173 = vadd.f32 %v141, 3.0
        %v174 = vadd.f32 %v142, 3.0
        %v175 = vadd.f32 %v143, 3.0
        %v176 = vadd.f32 %v144, 3.0
        %v177 = vadd.f32 %v145, 3.0
        %v178 = vadd.f32 %v146, 3.0
        %v179 = vadd.f32 %v147, 3.0
        %v180 = vadd.f32 %v148, 3.0
        %v181 = vadd.f32 %v149, 3.0
        %v182 = vadd.f32 %v150, 3.0
        %v183 = vadd.f32 %v151, 3.0
        %v184 = vadd.f32 %v152, 3.0
        %v185 = vadd.f32 %v153, 3.0
        %v186 = vadd.f32 %v154, 3.0
        %v187 = vadd.f32 %v155, 3.0
        %v188 = vadd.f32 %v156, 3.0
        %v189 = vadd.f32 %v157, 3.0
        %v190 = vadd.f32 %v158, 3.0
        %v191 = vadd.f32 %v159, 3.0
        %v192 = vadd.f32 %v160, 3.0
        %v193 = vadd.f32 %v161, 3.0
        %v194 = vadd.f32 %v162, 3.0
        %v195 = vadd.f32 %v163, 3.0
        %v196 = vadd.f32 %v164, 3.0
        %v197 = vadd.f32 %v165, 3.0
        %v198 = vadd.f32 %v166, 3.0
        %v199 = vadd.f32 %v167, 3.0
        %v200 = vadd.f32 %v168, 3.0
        %v201 = vmax.f32 %v169, 0.0
        %v202 = vmax.f32 %v170, 0.0
        %v203 = vmax.f32 %v171, 0.0
        %v204 = vmax.f32 %v172, 0.0
        %v205 = vmax.f32 %v173, 0.0
        %v206 = vmax.f32 %v174, 0.0
        %v207 = vmax.f32 %v175, 0.0
        %v208 = vmax.f32 %v176, 0.0
        %v209 = vmax.f32 %v177, 0.0
        %v210 = vmax.f32 %v178, 0.0
        %v211 = vmax.f32 %v179, 0.0
        %v212 = vmax.f32 %v180, 0.0
        %v213 = vmax.f32 %v181, 0.0
        %v214 = vmax.f32 %v182, 0.0
        %v215 = vmax.f32 %v183, 0.0
        %v216 = vmax.f32 %v184, 0.0
        %v217 = vmax.f32 %v185, 0.0
        %v218 = vmax.f32 %v186, 0.0
        %v219 = vmax.f32 %v187, 0.0
        %v220 = vmax.f32 %v188, 0.0
        %v221 = vmax.f32 %v189, 0.0
        %v222 = vmax.f32 %v190, 0.0
        %v223 = vmax.f32 %v191, 0.0
        %v224 = vmax.f32 %v192, 0.0
        %v225 = vmax.f32 %v193, 0.0
        %v226 = vmax.f32 %v194, 0.0
        %v227 = vmax.f32 %v195, 0.0
        %v228 = vmax.f32 %v196, 0.0
        %v229 = vmax.f32 %v197, 0.0
        %v230 = vmax.f32 %v198, 0.0
        %v231 = vmax.f32 %v199, 0.0
        %v232 = vmax.f32 %v200, 0.0
        %v233 = vmin.f32 %v201, 6.0
        %v234 = vmin.f32 %v202, 6.0
        %v235 = vmin.f32 %v203, 6.0
        %v236 = vmin.f32 %v204, 6.0
        %v237 = vmin.f32 %v205, 6.0
        %v238 = vmin.f32 %v206, 6.0
        %v239 = vmin.f32 %v207, 6.0
        %v240 = vmin.f32 %v208, 6.0
        %v241 = vmin.f32 %v209, 6.0
        %v242 = vmin.f32 %v210, 6.0
        %v243 = vmin.f32 %v211, 6.0
        %v244 = vmin.f32 %v212, 6.0
        %v245 = vmin.f32 %v213, 6.0
        %v246 = vmin.f32 %v214, 6.0
        %v247 = vmin.f32 %v215, 6.0
        %v248 = vmin.f32 %v216, 6.0
        %v249 = vmin.f32 %v217, 6.0
        %v250 = vmin.f32 %v218, 6.0
        %v251 = vmin.f32 %v219, 6.0
        %v252 = vmin.f32 %v220, 6.0
        %v253 = vmin.f32 %v221, 6.0
        %v254 = vmin.f32 %v222, 6.0
        %v255 = vmin.f32 %v223, 6.0
        %v256 = vmin.f32 %v224, 6.0
        %v257 = vmin.f32 %v225, 6.0
        %v258 = vmin.f32 %v226, 6.0
        %v259 = vmin.f32 %v227, 6.0
        %v260 = vmin.f32 %v228, 6.0
        %v261 = vmin.f32 %v229, 6.0
        %v262 = vmin.f32 %v230, 6.0
        %v263 = vmin.f32 %v231, 6.0
        %v264 = vmin.f32 %v232, 6.0
        %v265 = vmul.f32 %v233, 0.16666667
        %v266 = vmul.f32 %v234, 0.16666667
        %v267 = vmul.f32 %v235, 0.16666667
        %v268 = vmul.f32 %v236, 0.16666667
        %v269 = vmul.f32 %v237, 0.16666667
        %v270 = vmul.f32 %v238, 0.16666667
        %v271 = vmul.f32 %v239, 0.16666667
        %v272 = vmul.f32 %v240, 0.16666667
        %v273 = vmul.f32 %v241, 0.16666667
        %v274 = vmul.f32 %v242, 0.16666667
        %v275 = vmul.f32 %v243, 0.16666667
        %v276 = vmul.f32 %v244, 0.16666667
        %v277 = vmul.f32 %v245, 0.16666667
        %v278 = vmul.f32 %v246, 0.16666667
        %v279 = vmul.f32 %v247, 0.16666667
        %v280 = vmul.f32 %v248, 0.16666667
        %v281 = vmul.f32 %v249, 0.16666667
        %v282 = vmul.f32 %v250, 0.16666667
        %v283 = vmul.f32 %v251, 0.16666667
        %v284 = vmul.f32 %v252, 0.16666667
        %v285 = vmul.f32 %v253, 0.16666667
        %v286 = vmul.f32 %v254, 0.16666667
        %v287 = vmul.f32 %v255, 0.16666667
        %v288 = vmul.f32 %v256, 0.16666667
        %v289 = vmul.f32 %v257, 0.16666667
        %v290 = vmul.f32 %v258, 0.16666667
        %v291 = vmul.f32 %v259, 0.16666667
        %v292 = vmul.f32 %v260, 0.16666667
        %v293 = vmul.f32 %v261, 0.16666667
        %v294 = vmul.f32 %v262, 0.16666667
        %v295 = vmul.f32 %v263, 0.16666667
        %v296 = vmul.f32 %v264, 0.16666667
        %v297 = vmul.f32 %v137, %v265
        %v298 = vmul.f32 %v138, %v266
        %v299 = vmul.f32 %v139, %v267
        %v300 = vmul.f32 %v140, %v268
        %v301 = vmul.f32 %v141, %v269
        %v302 = vmul.f32 %v142, %v270
        %v303 = vmul.f32 %v143, %v271
        %v304 = vmul.f32 %v144, %v272
        %v305 = vmul.f32 %v145, %v273
        %v306 = vmul.f32 %v146, %v274
        %v307 = vmul.f32 %v147, %v275
        %v308 = vmul.f32 %v148, %v276
        %v309 = vmul.f32 %v149, %v277
        %v310 = vmul.f32 %v150, %v278
        %v311 = vmul.f32 %v151, %v279
        %v312 = vmul.f32 %v152, %v280
        %v313 = vmul.f32 %v153, %v281
        %v314 = vmul.f32 %v154, %v282
        %v315 = vmul.f32 %v155, %v283
        %v316 = vmul.f32 %v156, %v284
        %v317 = vmul.f32 %v157, %v285
        %v318 = vmul.f32 %v158, %v286
        %v319 = vmul.f32 %v159, %v287
        %v320 = vmul.f32 %v160, %v288
        %v321 = vmul.f32 %v161, %v289
        %v322 = vmul.f32 %v162, %v290
        %v323 = vmul.f32 %v163, %v291
        %v324 = vmul.f32 %v164, %v292
        %v325 = vmul.f32 %v165, %v293
        %v326 = vmul.f32 %v166, %v294
        %v327 = vmul.f32 %v167, %v295
        %v328 = vmul.f32 %v168, %v296
        %329 = vst [vmem:[%s134] sm:$0xff] %v297
        %330 = vst [vmem:[%s134 + $0x8] sm:$0xff] %v298
        %331 = vst [vmem:[%s134 + $0x10] sm:$0xff] %v299
        %332 = vst [vmem:[%s134 + $0x18] sm:$0xff] %v300
        %333 = vst [vmem:[%s134 + $0x20] sm:$0xff] %v301
        %334 = vst [vmem:[%s134 + $0x28] sm:$0xff] %v302
        %335 = vst [vmem:[%s134 + $0x30] sm:$0xff] %v303
        %336 = vst [vmem:[%s134 + $0x38] sm:$0xff] %v304
        %337 = vst [vmem:[%s134 + $0x40] sm:$0xff] %v305
        %338 = vst [vmem:[%s134 + $0x48] sm:$0xff] %v306
        %339 = vst [vmem:[%s134 + $0x50] sm:$0xff] %v307
        %340 = vst [vmem:[%s134 + $0x58] sm:$0xff] %v308
        %341 = vst [vmem:[%s134 + $0x60] sm:$0xff] %v309
        %342 = vst [vmem:[%s134 + $0x68] sm:$0xff] %v310
        %343 = vst [vmem:[%s134 + $0x70] sm:$0xff] %v311
        %344 = vst [vmem:[%s134 + $0x78] sm:$0xff] %v312
        %345 = vst [vmem:[%s134 + $0x80] sm:$0xff] %v313
        %346 = vst [vmem:[%s134 + $0x88] sm:$0xff] %v314
        %347 = vst [vmem:[%s134 + $0x90] sm:$0xff] %v315
        %348 = vst [vmem:[%s134 + $0x98] sm:$0xff] %v316
        %349 = vst [vmem:[%s134 + $0xa0] sm:$0xff] %v317
        %350 = vst [vmem:[%s134 + $0xa8] sm:$0xff] %v318
        %351 = vst [vmem:[%s134 + $0xb0] sm:$0xff] %v319
        %352 = vst [vmem:[%s134 + $0xb8] sm:$0xff] %v320
        %353 = vst [vmem:[%s134 + $0xc0] sm:$0xff] %v321
        %354 = vst [vmem:[%s134 + $0xc8] sm:$0xff] %v322
        %355 = vst [vmem:[%s134 + $0xd0] sm:$0xff] %v323
        %356 = vst [vmem:[%s134 + $0xd8] sm:$0xff] %v324
        %357 = vst [vmem:[%s134 + $0xe0] sm:$0xff] %v325
        %358 = vst [vmem:[%s134 + $0xe8] sm:$0xff] %v326
        %359 = vst [vmem:[%s134 + $0xf0] sm:$0xff] %v327
        %360 = vst [vmem:[%s134 + $0xf8] sm:$0xff] %v328
        %s361 = sand.u32 %s52, 1
        %s362 = scalar_lea.sflag [#allocation4], %s361
        %s363 = sand.u32 %s52, 1
        %s364 = smul.addr %s363, 256
        %s365 = scalar_lea.vmem [#allocation5], %s364
        // Predicated region
        $region29: #{tpu_custom_call.1} parent=23 // pred_check
          %p366 = pneg %p62
        $region30: #{tpu_custom_call.1} parent=23 // pred_check_branch
          %368 = sbr.rel (%p366) target = $region32
        $region31: #{tpu_custom_call.1} parent=23 // pred_region
          %s369 = smul.u32 32, %s18
          %s371 = ssub.s32 4096, 4096
          %372 = vsyncadd %s362, %s371
          %s373 = smul.addr %s369, 128
          %s374 = scalar_lea.hbm %s1, %s373
          %s375 = sshll.u32 %s365, 4
          %s376 = int_to_ptr.vmem [resolvable:$true] %s375
          %381 = dma.vmem_to_hbm [thread:$0]  %s376, 4096, %s374, %s362, 128, 128, 8
        $region32: #{tpu_custom_call.1} parent=23 // pred_fallthru
          _
      $region24: #{tpu_custom_call.1} parent=5 // pred_fallthru
        _
      %p382 = scmp.le.s32.totalorder 2, %s13
      // Predicated region
      $region33: #{tpu_custom_call.1} parent=5 // pred_check
        %p383 = pneg %p382
      $region34: #{tpu_custom_call.1} parent=5 // pred_check_branch
        %385 = sbr.rel (%p383) target = $region36
      $region35: #{tpu_custom_call.1} parent=5 // pred_region
        %s386 = ssub.s32 %s13, 2
        // Predicated region
        $region37: #{tpu_custom_call.1} parent=35 // pred_check
          %p387 = pneg %p68
        $region38: #{tpu_custom_call.1} parent=35 // pred_check_branch
          %389 = sbr.rel (%p387) target = $region40
        $region39: #{tpu_custom_call.1} parent=35 // pred_region
          %s390 = sand.u32 %s53, 1
          %s391 = scalar_lea.sflag [#allocation4], %s390
          %s392 = sand.u32 %s53, 1
          %s393 = smul.addr %s392, 256
          %s394 = scalar_lea.vmem [#allocation5], %s393
          %395 = dma.done %s391, 4096
        $region40: #{tpu_custom_call.1} parent=35 // pred_fallthru
          _
      $region36: #{tpu_custom_call.1} parent=5 // pred_fallthru
        _
    $region6: #{tpu_custom_call.1} parent=1 // loop_footer
      %s17 = sadd.s32 1, %s13
    $region7: #{tpu_custom_call.1} parent=1 // loop_footer_branch
      %12 = sbr.rel target = $region3
    $region8: #{tpu_custom_call.1} parent=1 // loop_exit
      _
    %396 = vsyncpa [#allocation3], 1
    %s397 = scalar_lea.sflag [#allocation3], 1
    %398 = vsyncpa %s397, 1
    %399 = vsyncpa [#allocation4], 1
    %s400 = scalar_lea.sflag [#allocation4], 1
    %401 = vsyncpa %s400, 1

</llo_original>
